<compile_context>
chip_gen: v7x
topology: tpu7x:2x2x1
jax: 0.10.0
libtpu: 0.0.40
codegen_flags: <defaults>
</compile_context>

<pallas_src>
import jax
import jax.numpy as jnp
from jax import lax
from jax.experimental import pallas as pl
from jax.experimental.pallas import tpu as pltpu


def _scse_kernel(x_ref, wsq_ref, w1t_ref, b1_ref, w2_ref, b2_ref, o_ref):
    """One image.

    x_ref:   (1, C, HW)  input features (channels on sublanes, pixels on lanes)
    wsq_ref: (C, 1)      SpatialAttention2d squeeze conv weight (no bias)
    w1t_ref: (C, Cmid)   GAB conv1 weight, transposed to (in, out)
    b1_ref:  (1, Cmid)   GAB conv1 bias
    w2_ref:  (C, Cmid)   GAB conv2 weight (out, in)
    b2_ref:  (C, 1)      GAB conv2 bias
    o_ref:   (1, C, HW)  output
    """
    x = x_ref[0]                                   # (C, HW), f32
    hw = x.shape[1]

    # --- SpatialAttention2d: per-pixel channel squeeze (1x1 conv, no bias) + sigmoid ---
    s_gate = jax.nn.sigmoid(
        jnp.sum(x * wsq_ref[...], axis=0, keepdims=True))            # (1, HW)

    # --- GAB channel attention: global average pool + two tiny FC layers ---
    g = jnp.sum(x, axis=1, keepdims=True) * (1.0 / hw)               # (C, 1)
    z1 = jnp.maximum(
        jnp.sum(w1t_ref[...] * g, axis=0, keepdims=True) + b1_ref[...], 0.0)   # (1, Cmid)
    c_gate = jax.nn.sigmoid(
        jnp.sum(w2_ref[...] * z1, axis=1, keepdims=True) + b2_ref[...])        # (C, 1)

    # --- fused output: x*satt_gate + x*catt_gate == x * (s_gate + c_gate) ---
    o_ref[0] = x * (s_gate + c_gate)


def scse_forward(x_nchw, params):
    """Forward pass of SCse(dim=C) on an NCHW input, matching the PyTorch module."""
    N, C, H, W = x_nchw.shape
    Cmid = params["c1_w"].shape[0]
    HW = H * W

    x3 = x_nchw.reshape(N, C, HW)                        # free reshape (contiguous dims)
    wsq = params["sq_w"].reshape(C, 1)                   # (1,C,1,1) -> (C,1)
    w1t = params["c1_w"][:, :, 0, 0].T                   # (Cmid,C)  -> (C,Cmid)
    b1 = params["c1_b"].reshape(1, Cmid)
    w2 = params["c2_w"][:, :, 0, 0]                      # (C,Cmid)
    b2 = params["c2_b"].reshape(C, 1)

    const = lambda shape: pl.BlockSpec(shape, lambda b: (0,) * len(shape))

    out = pl.pallas_call(
        _scse_kernel,
        out_shape=jax.ShapeDtypeStruct((N, C, HW), x_nchw.dtype),
        grid_spec=pltpu.PrefetchScalarGridSpec(
            num_scalar_prefetch=0,
            grid=(N,),
            in_specs=[
                pl.BlockSpec((1, C, HW), lambda b: (b, 0, 0)),
                const((C, 1)),
                const((C, Cmid)),
                const((1, Cmid)),
                const((C, Cmid)),
                const((C, 1)),
            ],
            out_specs=pl.BlockSpec((1, C, HW), lambda b: (b, 0, 0)),
        ),
        compiler_params=pltpu.CompilerParams(
            dimension_semantics=("parallel",)),
    )(x3, wsq, w1t, b1, w2, b2)

    return out.reshape(N, C, H, W)


# ---------------- pure-JAX reference for verification ----------------
def _ref_scse(x, p):
    HIGHEST = lax.Precision.HIGHEST
    C = x.shape[1]
    # SpatialAttention2d
    w_sq = p["sq_w"].reshape(C)
    s = jax.nn.sigmoid(jnp.sum(x * w_sq[None, :, None, None], axis=1, keepdims=True))
    satt = x * s
    # GAB
    g = jnp.mean(x, axis=(2, 3))                              # (N, C)
    w1 = p["c1_w"][:, :, 0, 0]                                # (Cmid, C)
    w2 = p["c2_w"][:, :, 0, 0]                                # (C, Cmid)
    z = jnp.maximum(jnp.dot(g, w1.T, precision=HIGHEST) + p["c1_b"][None, :], 0.0)
    z = jax.nn.sigmoid(jnp.dot(z, w2.T, precision=HIGHEST) + p["c2_b"][None, :])
    catt = x * z[:, :, None, None]
    return satt + catt


def _make_params(key, dim, reduction=4):
    mid = dim // reduction
    ks = jax.random.split(key, 5)
    return {
        "sq_w": 0.1 * jax.random.normal(ks[0], (1, dim, 1, 1), jnp.float32),   # squeeze conv (no bias)
        "c1_w": 0.1 * jax.random.normal(ks[1], (mid, dim, 1, 1), jnp.float32),  # GAB conv1
        "c1_b": 0.1 * jax.random.normal(ks[2], (mid,), jnp.float32),
        "c2_w": 0.1 * jax.random.normal(ks[3], (dim, mid, 1, 1), jnp.float32),  # GAB conv2
        "c2_b": 0.1 * jax.random.normal(ks[4], (dim,), jnp.float32),
    }


if __name__ == "__main__":
    # Small, lane/sublane-friendly shapes: batch=2, dim=128 (reduction=4 -> 32), spatial 16x16.
    N, C, H, W = 2, 128, 16, 16

    key = jax.random.PRNGKey(0)
    kx, kp = jax.random.split(key)
    x = jax.random.normal(kx, (N, C, H, W), jnp.float32)
    params = _make_params(kp, C, reduction=4)

    out = jax.block_until_ready(scse_forward(x, params))
    ref = jax.block_until_ready(_ref_scse(x, params))

    assert out.shape == (N, C, H, W), out.shape
    assert bool(jnp.all(jnp.isfinite(out)))
    max_err = float(jnp.max(jnp.abs(out - ref)))
    assert jnp.allclose(out, ref, rtol=1e-3, atol=1e-3), max_err
    print("KERNEL_OK")
</pallas_src>

<mosaic_0001>
module attributes {stable_mosaic.version = 11 : i64} {
  func.func @_scse_kernel(%arg0: i32, %arg1: memref<1x128x256xf32, #tpu.memory_space<vmem>>, %arg2: memref<128x1xf32, #tpu.memory_space<vmem>>, %arg3: memref<128x32xf32, #tpu.memory_space<vmem>>, %arg4: memref<1x32xf32, #tpu.memory_space<vmem>>, %arg5: memref<128x32xf32, #tpu.memory_space<vmem>>, %arg6: memref<128x1xf32, #tpu.memory_space<vmem>>, %arg7: memref<1x128x256xf32, #tpu.memory_space<vmem>>) attributes {dimension_semantics = [#tpu.dimension_semantics<parallel>], iteration_bounds = array<i64: 2>, scalar_prefetch = 0 : i64, scratch_operands = 0 : i64, tpu.core_type = #tpu.core_type<tc>, window_params = [{transform_indices = @transform_0, window_bounds = array<i64: 1, 128, 256>}, {pipeline_mode = #tpu.pipeline_mode<synchronous>, transform_indices = @transform_1, window_bounds = array<i64: 128, 1>}, {pipeline_mode = #tpu.pipeline_mode<synchronous>, transform_indices = @transform_2, window_bounds = array<i64: 128, 32>}, {pipeline_mode = #tpu.pipeline_mode<synchronous>, transform_indices = @transform_3, window_bounds = array<i64: 1, 32>}, {pipeline_mode = #tpu.pipeline_mode<synchronous>, transform_indices = @transform_4, window_bounds = array<i64: 128, 32>}, {pipeline_mode = #tpu.pipeline_mode<synchronous>, transform_indices = @transform_5, window_bounds = array<i64: 128, 1>}, {transform_indices = @transform_6, window_bounds = array<i64: 1, 128, 256>}]} {
    %c0 = arith.constant 0 : index
    %c0_0 = arith.constant 0 : index
    %c0_1 = arith.constant 0 : index
    %0 = vector.load %arg1[%c0, %c0_0, %c0_1] : memref<1x128x256xf32, #tpu.memory_space<vmem>>, vector<1x128x256xf32>
    %1 = vector.shape_cast %0 : vector<1x128x256xf32> to vector<128x256xf32>
    %c0_2 = arith.constant 0 : index
    %c0_3 = arith.constant 0 : index
    %2 = vector.load %arg2[%c0_2, %c0_3] : memref<128x1xf32, #tpu.memory_space<vmem>>, vector<128x1xf32>
    %3 = vector.broadcast %2 : vector<128x1xf32> to vector<128x256xf32>
    %4 = arith.mulf %1, %3 : vector<128x256xf32>
    %cst = arith.constant dense<0.000000e+00> : vector<256xf32>
    %5 = vector.multi_reduction <add>, %4, %cst [0] : vector<128x256xf32> to vector<256xf32>
    %6 = vector.shape_cast %5 : vector<256xf32> to vector<1x256xf32>
    %7 = arith.negf %6 : vector<1x256xf32>
    %8 = math.exp %7 : vector<1x256xf32>
    %cst_4 = arith.constant 1.000000e+00 : f32
    %9 = vector.broadcast %cst_4 : f32 to vector<1x256xf32>
    %10 = arith.addf %9, %8 : vector<1x256xf32>
    %11 = arith.divf %9, %10 : vector<1x256xf32>
    %cst_5 = arith.constant dense<0.000000e+00> : vector<128xf32>
    %12 = vector.multi_reduction <add>, %1, %cst_5 [1] : vector<128x256xf32> to vector<128xf32>
    %13 = vector.shape_cast %12 : vector<128xf32> to vector<128x1xf32>
    %cst_6 = arith.constant 3.906250e-03 : f32
    %14 = vector.broadcast %cst_6 : f32 to vector<128x1xf32>
    %15 = arith.mulf %13, %14 : vector<128x1xf32>
    %c0_7 = arith.constant 0 : index
    %c0_8 = arith.constant 0 : index
    %16 = vector.load %arg3[%c0_7, %c0_8] : memref<128x32xf32, #tpu.memory_space<vmem>>, vector<128x32xf32>
    %17 = vector.broadcast %15 : vector<128x1xf32> to vector<128x32xf32>
    %18 = arith.mulf %16, %17 : vector<128x32xf32>
    %cst_9 = arith.constant dense<0.000000e+00> : vector<32xf32>
    %19 = vector.multi_reduction <add>, %18, %cst_9 [0] : vector<128x32xf32> to vector<32xf32>
    %20 = vector.shape_cast %19 : vector<32xf32> to vector<1x32xf32>
    %c0_10 = arith.constant 0 : index
    %c0_11 = arith.constant 0 : index
    %21 = vector.load %arg4[%c0_10, %c0_11] : memref<1x32xf32, #tpu.memory_space<vmem>>, vector<1x32xf32>
    %22 = arith.addf %20, %21 : vector<1x32xf32>
    %cst_12 = arith.constant 0.000000e+00 : f32
    %23 = vector.broadcast %cst_12 : f32 to vector<1x32xf32>
    %24 = arith.maximumf %22, %23 : vector<1x32xf32>
    %c0_13 = arith.constant 0 : index
    %c0_14 = arith.constant 0 : index
    %25 = vector.load %arg5[%c0_13, %c0_14] : memref<128x32xf32, #tpu.memory_space<vmem>>, vector<128x32xf32>
    %26 = vector.broadcast %24 : vector<1x32xf32> to vector<128x32xf32>
    %27 = arith.mulf %25, %26 : vector<128x32xf32>
    %cst_15 = arith.constant dense<0.000000e+00> : vector<128xf32>
    %28 = vector.multi_reduction <add>, %27, %cst_15 [1] : vector<128x32xf32> to vector<128xf32>
    %29 = vector.shape_cast %28 : vector<128xf32> to vector<128x1xf32>
    %c0_16 = arith.constant 0 : index
    %c0_17 = arith.constant 0 : index
    %30 = vector.load %arg6[%c0_16, %c0_17] : memref<128x1xf32, #tpu.memory_space<vmem>>, vector<128x1xf32>
    %31 = arith.addf %29, %30 : vector<128x1xf32>
    %32 = arith.negf %31 : vector<128x1xf32>
    %33 = math.exp %32 : vector<128x1xf32>
    %cst_18 = arith.constant 1.000000e+00 : f32
    %34 = vector.broadcast %cst_18 : f32 to vector<128x1xf32>
    %35 = arith.addf %34, %33 : vector<128x1xf32>
    %36 = arith.divf %34, %35 : vector<128x1xf32>
    %37 = vector.broadcast %11 : vector<1x256xf32> to vector<128x256xf32>
    %38 = vector.broadcast %36 : vector<128x1xf32> to vector<128x256xf32>
    %39 = arith.addf %37, %38 : vector<128x256xf32>
    %40 = arith.mulf %1, %39 : vector<128x256xf32>
    %c0_19 = arith.constant 0 : index
    %c0_20 = arith.constant 0 : index
    %c0_21 = arith.constant 0 : index
    %41 = vector.load %arg7[%c0_19, %c0_20, %c0_21] : memref<1x128x256xf32, #tpu.memory_space<vmem>>, vector<1x128x256xf32>
    %42 = vector.shape_cast %41 : vector<1x128x256xf32> to vector<128x256xf32>
    %43 = vector.shape_cast %40 : vector<128x256xf32> to vector<1x128x256xf32>
    tpu.vector_store %arg7[%c0_19, %c0_20, %c0_21], %43 {strides = array<i32>} : memref<1x128x256xf32, #tpu.memory_space<vmem>>, vector<1x128x256xf32>,
    return
  }
  func.func @transform_0(%arg0: i32) -> (i32, i32, i32) {
    %c0_i32 = arith.constant 0 : i32
    %c0_i32_0 = arith.constant 0 : i32
    %c0_i32_1 = arith.constant 0 : i32
    return %arg0, %c0_i32, %c0_i32_0 : i32, i32, i32
  }
  func.func @transform_1(%arg0: i32) -> (i32, i32) {
    %c0_i32 = arith.constant 0 : i32
    %c0_i32_0 = arith.constant 0 : i32
    %c0_i32_1 = arith.constant 0 : i32
    return %c0_i32, %c0_i32_0 : i32, i32
  }
  func.func @transform_2(%arg0: i32) -> (i32, i32) {
    %c0_i32 = arith.constant 0 : i32
    %c0_i32_0 = arith.constant 0 : i32
    %c0_i32_1 = arith.constant 0 : i32
    return %c0_i32, %c0_i32_0 : i32, i32
  }
  func.func @transform_3(%arg0: i32) -> (i32, i32) {
    %c0_i32 = arith.constant 0 : i32
    %c0_i32_0 = arith.constant 0 : i32
    %c0_i32_1 = arith.constant 0 : i32
    return %c0_i32, %c0_i32_0 : i32, i32
  }
  func.func @transform_4(%arg0: i32) -> (i32, i32) {
    %c0_i32 = arith.constant 0 : i32
    %c0_i32_0 = arith.constant 0 : i32
    %c0_i32_1 = arith.constant 0 : i32
    return %c0_i32, %c0_i32_0 : i32, i32
  }
  func.func @transform_5(%arg0: i32) -> (i32, i32) {
    %c0_i32 = arith.constant 0 : i32
    %c0_i32_0 = arith.constant 0 : i32
    %c0_i32_1 = arith.constant 0 : i32
    return %c0_i32, %c0_i32_0 : i32, i32
  }
  func.func @transform_6(%arg0: i32) -> (i32, i32, i32) {
    %c0_i32 = arith.constant 0 : i32
    %c0_i32_0 = arith.constant 0 : i32
    %c0_i32_1 = arith.constant 0 : i32
    return %arg0, %c0_i32, %c0_i32_0 : i32, i32, i32
  }
}

</mosaic_0001>

<llo_original>
// kernel: tpu_custom_call.1
$region0: #{tpu_custom_call.1}
  #allocation0 [shape = 'u32[]', space=smem, size = 0x4, offset = 0x4, fixed_abs, tag = 'smem constant byte address 0x4 - core index']
  #allocation1 [shape = 'u32[144,128]{1,0:T(1,128)}', space=vmem, size = 0x12000, scoped, tag = 'internal scratch']
  %s0 = inlined_call_operand.vmem [shape: f32[2,128,256], index: 0, kind: input, shape index: {}]
  %s1 = inlined_call_operand.vmem [shape: f32[128,1], index: 1, kind: input, shape index: {}]
  %s2 = inlined_call_operand.vmem [shape: f32[128,32], index: 2, kind: input, shape index: {}]
  %s3 = inlined_call_operand.vmem [shape: f32[1,32], index: 3, kind: input, shape index: {}]
  %s4 = inlined_call_operand.vmem [shape: f32[128,32], index: 4, kind: input, shape index: {}]
  %s5 = inlined_call_operand.vmem [shape: f32[128,1], index: 5, kind: input, shape index: {}]
  %s6 = inlined_call_operand.hbm [shape: f32[2,128,256], index: 6, kind: output, shape index: {}]
  %s7 = sld [smem:[#allocation0]]
  $region57: #{tpu_custom_call.1} parent=0
    _
  %s9 = ssub.s32 1, %s7
  %s10 = scalar_select 0, %s9, %s7
  $region1: #{tpu_custom_call.1} parent=0
    #allocation2 [shape = 'u8[262144]{0}', space=vmem, size = 0x40000, scoped, tag = 'output window, operand 0']
    #allocation3 [shape = 's32[2]{0}', space=sflag, size = 0x8, scoped, tag = 'scoped memory for tpu_custom_call.1']
    %11 = vsyncpa [#allocation3], 0
    %s12 = scalar_lea.sflag [#allocation3], 1
    %13 = vsyncpa %s12, 0
    loop: start=0, step=1, limit=4
    $region2: #{tpu_custom_call.1} parent=1 // loop_pre_header
      _
    $region3: #{tpu_custom_call.1} parent=1 // loop_header
      %s15 = sphi 0, %s19
      %p16 = scmp.ge.s32.totalorder %s15, 4
      %s25 = sphi 0, %s27
      %s28 = sphi 0, %s25
      %s29 = sphi 0, %s28
      %s45 = sphi 0, %s29
      %s49 = sphi 0, %s49
      %s51 = sphi 0, %s49
      %s52 = sphi 0, %s51
      %s66 = sphi 0, %s52
      %s70 = sphi 0, %s70
      %s72 = sphi 0, %s70
      %s73 = sphi 0, %s72
      %s87 = sphi 0, %s73
      %s91 = sphi 0, %s91
      %s93 = sphi 0, %s91
      %s94 = sphi 0, %s93
      %s108 = sphi 0, %s94
      %s112 = sphi 0, %s112
      %s114 = sphi 0, %s112
      %s115 = sphi 0, %s114
      %s129 = sphi 0, %s115
      %s133 = sphi 0, %s133
      %s135 = sphi 0, %s133
      %s136 = sphi 0, %s135
      %s150 = sphi 0, %s136
      %s156 = sphi 0, %s158
      %s159 = sphi 0, %s156
      %s160 = sphi 0, %s159
      %s176 = sphi 0, %s160
    $region4: #{tpu_custom_call.1} parent=1 // loop_header_branch
      %18 = sbr.rel (%p16) target = $region8
    $region5: #{tpu_custom_call.1} parent=1 // loop_body
      %s20 = ssub.s32 %s15, 1
      %s21 = ssub.s32 %s15, 2
      %s22 = sadd.s32 %s15, 1
      %s23 = ssub.s32 %s15, %s22
      %p24 = scmp.eq.s32.totalorder %s23, 0
      %s26 = sadd.s32 %s25, 1
      %s27 = scalar_select %p24, %s25, %s26
      %p30 = pneg %p24
      %p31 = scmp.eq.s32.totalorder %s15, 1
      %p32 = por %p30, %p31
      %p33 = scmp.ne.s32.totalorder %s25, %s28
      %p34 = scmp.eq.s32.totalorder %s15, 0
      %p35 = por %p33, %p34
      %p36 = scmp.ne.s32.totalorder %s25, %s28
      %p37 = scmp.eq.s32.totalorder %s20, 1
      %p38 = por %p36, %p37
      %p39 = scmp.ne.s32.totalorder %s28, %s29
      %p40 = scmp.eq.s32.totalorder %s20, 0
      %p41 = por %p39, %p40
      %p42 = scmp.ne.s32.totalorder %s28, %s29
      %p43 = scmp.eq.s32.totalorder %s21, 1
      %p44 = por %p42, %p43
      %p46 = scmp.ne.s32.totalorder %s29, %s45
      %p47 = scmp.eq.s32.totalorder %s21, 0
      %p48 = por %p46, %p47
      %s50 = sadd.s32 %s49, 1
      %p53 = scmp.eq.s32.totalorder %s15, 1
      %p54 = scmp.ne.s32.totalorder %s49, %s51
      %p55 = scmp.eq.s32.totalorder %s15, 0
      %p56 = por %p54, %p55
      %p57 = scmp.ne.s32.totalorder %s49, %s51
      %p58 = scmp.eq.s32.totalorder %s20, 1
      %p59 = por %p57, %p58
      %p60 = scmp.ne.s32.totalorder %s51, %s52
      %p61 = scmp.eq.s32.totalorder %s20, 0
      %p62 = por %p60, %p61
      %p63 = scmp.ne.s32.totalorder %s51, %s52
      %p64 = scmp.eq.s32.totalorder %s21, 1
      %p65 = por %p63, %p64
      %p67 = scmp.ne.s32.totalorder %s52, %s66
      %p68 = scmp.eq.s32.totalorder %s21, 0
      %p69 = por %p67, %p68
      %s71 = sadd.s32 %s70, 1
      %p74 = scmp.eq.s32.totalorder %s15, 1
      %p75 = scmp.ne.s32.totalorder %s70, %s72
      %p76 = scmp.eq.s32.totalorder %s15, 0
      %p77 = por %p75, %p76
      %p78 = scmp.ne.s32.totalorder %s70, %s72
      %p79 = scmp.eq.s32.totalorder %s20, 1
      %p80 = por %p78, %p79
      %p81 = scmp.ne.s32.totalorder %s72, %s73
      %p82 = scmp.eq.s32.totalorder %s20, 0
      %p83 = por %p81, %p82
      %p84 = scmp.ne.s32.totalorder %s72, %s73
      %p85 = scmp.eq.s32.totalorder %s21, 1
      %p86 = por %p84, %p85
      %p88 = scmp.ne.s32.totalorder %s73, %s87
      %p89 = scmp.eq.s32.totalorder %s21, 0
      %p90 = por %p88, %p89
      %s92 = sadd.s32 %s91, 1
      %p95 = scmp.eq.s32.totalorder %s15, 1
      %p96 = scmp.ne.s32.totalorder %s91, %s93
      %p97 = scmp.eq.s32.totalorder %s15, 0
      %p98 = por %p96, %p97
      %p99 = scmp.ne.s32.totalorder %s91, %s93
      %p100 = scmp.eq.s32.totalorder %s20, 1
      %p101 = por %p99, %p100
      %p102 = scmp.ne.s32.totalorder %s93, %s94
      %p103 = scmp.eq.s32.totalorder %s20, 0
      %p104 = por %p102, %p103
      %p105 = scmp.ne.s32.totalorder %s93, %s94
      %p106 = scmp.eq.s32.totalorder %s21, 1
      %p107 = por %p105, %p106
      %p109 = scmp.ne.s32.totalorder %s94, %s108
      %p110 = scmp.eq.s32.totalorder %s21, 0
      %p111 = por %p109, %p110
      %s113 = sadd.s32 %s112, 1
      %p116 = scmp.eq.s32.totalorder %s15, 1
      %p117 = scmp.ne.s32.totalorder %s112, %s114
      %p118 = scmp.eq.s32.totalorder %s15, 0
      %p119 = por %p117, %p118
      %p120 = scmp.ne.s32.totalorder %s112, %s114
      %p121 = scmp.eq.s32.totalorder %s20, 1
      %p122 = por %p120, %p121
      %p123 = scmp.ne.s32.totalorder %s114, %s115
      %p124 = scmp.eq.s32.totalorder %s20, 0
      %p125 = por %p123, %p124
      %p126 = scmp.ne.s32.totalorder %s114, %s115
      %p127 = scmp.eq.s32.totalorder %s21, 1
      %p128 = por %p126, %p127
      %p130 = scmp.ne.s32.totalorder %s115, %s129
      %p131 = scmp.eq.s32.totalorder %s21, 0
      %p132 = por %p130, %p131
      %s134 = sadd.s32 %s133, 1
      %p137 = scmp.eq.s32.totalorder %s15, 1
      %p138 = scmp.ne.s32.totalorder %s133, %s135
      %p139 = scmp.eq.s32.totalorder %s15, 0
      %p140 = por %p138, %p139
      %p141 = scmp.ne.s32.totalorder %s133, %s135
      %p142 = scmp.eq.s32.totalorder %s20, 1
      %p143 = por %p141, %p142
      %p144 = scmp.ne.s32.totalorder %s135, %s136
      %p145 = scmp.eq.s32.totalorder %s20, 0
      %p146 = por %p144, %p145
      %p147 = scmp.ne.s32.totalorder %s135, %s136
      %p148 = scmp.eq.s32.totalorder %s21, 1
      %p149 = por %p147, %p148
      %p151 = scmp.ne.s32.totalorder %s136, %s150
      %p152 = scmp.eq.s32.totalorder %s21, 0
      %p153 = por %p151, %p152
      %s154 = ssub.s32 %s15, %s22
      %p155 = scmp.eq.s32.totalorder %s154, 0
      %s157 = sadd.s32 %s156, 1
      %s158 = scalar_select %p155, %s156, %s157
      %p161 = pneg %p155
      %p162 = scmp.eq.s32.totalorder %s15, 1
      %p163 = por %p161, %p162
      %p164 = scmp.ne.s32.totalorder %s156, %s159
      %p165 = scmp.eq.s32.totalorder %s15, 0
      %p166 = por %p164, %p165
      %p167 = scmp.ne.s32.totalorder %s156, %s159
      %p168 = scmp.eq.s32.totalorder %s20, 1
      %p169 = por %p167, %p168
      %p170 = scmp.ne.s32.totalorder %s159, %s160
      %p171 = scmp.eq.s32.totalorder %s20, 0
      %p172 = por %p170, %p171
      %p173 = scmp.ne.s32.totalorder %s159, %s160
      %p174 = scmp.eq.s32.totalorder %s21, 1
      %p175 = por %p173, %p174
      %p177 = scmp.ne.s32.totalorder %s160, %s176
      %p178 = scmp.eq.s32.totalorder %s21, 0
      %p179 = por %p177, %p178
      %p180 = scmp.le.s32.totalorder 1, %s15
      %p181 = scmp.lt.s32.totalorder %s15, 3
      %p182 = pnand %p180, %p181
      %p183 = pneg %p182
      // Predicated region
      $region9: #{tpu_custom_call.1} parent=5 // pred_check
        _
      $region10: #{tpu_custom_call.1} parent=5 // pred_check_branch
        %185 = sbr.rel (%p182) target = $region12
      $region11: #{tpu_custom_call.1} parent=5 // pred_region
        %s186 = ssub.s32 %s15, 1
        // Predicated region
        $region13: #{tpu_custom_call.1} parent=11 // pred_check
          %p187 = pneg %p62
        $region14: #{tpu_custom_call.1} parent=11 // pred_check_branch
          %189 = sbr.rel (%p187) target = $region16
        $region15: #{tpu_custom_call.1} parent=11 // pred_region
          _
        $region16: #{tpu_custom_call.1} parent=11 // pred_fallthru
          _
        // Predicated region
        $region17: #{tpu_custom_call.1} parent=11 // pred_check
          %p190 = pneg %p83
        $region18: #{tpu_custom_call.1} parent=11 // pred_check_branch
          %192 = sbr.rel (%p190) target = $region20
        $region19: #{tpu_custom_call.1} parent=11 // pred_region
          _
        $region20: #{tpu_custom_call.1} parent=11 // pred_fallthru
          _
        // Predicated region
        $region21: #{tpu_custom_call.1} parent=11 // pred_check
          %p193 = pneg %p104
        $region22: #{tpu_custom_call.1} parent=11 // pred_check_branch
          %195 = sbr.rel (%p193) target = $region24
        $region23: #{tpu_custom_call.1} parent=11 // pred_region
          _
        $region24: #{tpu_custom_call.1} parent=11 // pred_fallthru
          _
        // Predicated region
        $region25: #{tpu_custom_call.1} parent=11 // pred_check
          %p196 = pneg %p125
        $region26: #{tpu_custom_call.1} parent=11 // pred_check_branch
          %198 = sbr.rel (%p196) target = $region28
        $region27: #{tpu_custom_call.1} parent=11 // pred_region
          _
        $region28: #{tpu_custom_call.1} parent=11 // pred_fallthru
          _
        // Predicated region
        $region29: #{tpu_custom_call.1} parent=11 // pred_check
          %p199 = pneg %p146
        $region30: #{tpu_custom_call.1} parent=11 // pred_check_branch
          %201 = sbr.rel (%p199) target = $region32
        $region31: #{tpu_custom_call.1} parent=11 // pred_region
          _
        $region32: #{tpu_custom_call.1} parent=11 // pred_fallthru
          _
      $region12: #{tpu_custom_call.1} parent=5 // pred_fallthru
        _
      %p202 = scmp.lt.s32.totalorder %s15, 2
      // Predicated region
      $region33: #{tpu_custom_call.1} parent=5 // pred_check
        %p203 = pneg %p202
      $region34: #{tpu_custom_call.1} parent=5 // pred_check_branch
        %205 = sbr.rel (%p203) target = $region36
      $region35: #{tpu_custom_call.1} parent=5 // pred_region
        // Predicated region
        $region37: #{tpu_custom_call.1} parent=35 // pred_check
          %p206 = pneg %p35
        $region38: #{tpu_custom_call.1} parent=35 // pred_check_branch
          %208 = sbr.rel (%p206) target = $region40
        $region39: #{tpu_custom_call.1} parent=35 // pred_region
          %p209 = scmp.lt.s32.totalorder %s15, 1
          %s210 = scalar_select %p209, %s15, 1
          %s211 = smul.addr %s210, 32
          %s212 = smul.addr %s211, 8
          %s213 = scalar_lea.vmem %s0, %s212
        $region40: #{tpu_custom_call.1} parent=35 // pred_fallthru
          _
      $region36: #{tpu_custom_call.1} parent=5 // pred_fallthru
        _
      %p214 = scmp.le.s32.totalorder 1, %s15
      %p215 = scmp.lt.s32.totalorder %s15, 3
      %p216 = pnand %p214, %p215
      %p217 = pneg %p216
      // Predicated region
      $region41: #{tpu_custom_call.1} parent=5 // pred_check
        _
      $region42: #{tpu_custom_call.1} parent=5 // pred_check_branch
        %219 = sbr.rel (%p216) target = $region44
      $region43: #{tpu_custom_call.1} parent=5 // pred_region
        %s220 = ssub.s32 %s15, 1
        %p221 = scmp.lt.s32.totalorder %s20, 1
        %s222 = scalar_select %p221, %s20, 1
        %s223 = smul.addr %s222, 32
        %s224 = smul.addr %s223, 8
        %s225 = scalar_lea.vmem %s0, %s224
        %p226 = pneg %p41
        %p227 = pneg %p38
        %p228 = pneg %p62
        %p229 = pneg %p59
        %p230 = pneg %p83
        %p231 = pneg %p80
        %p232 = pneg %p104
        %p233 = pneg %p101
        %p234 = pneg %p125
        %p235 = pneg %p122
        %p236 = pneg %p146
        %p237 = pneg %p143
        %p238 = pneg %p172
        %p239 = pneg %p169
        %s240 = sand.u32 %s159, 1
        %s241 = scalar_lea.sflag [#allocation3], %s240
        %s242 = sand.u32 %s159, 1
        %s243 = smul.addr %s242, 256
        %s244 = scalar_lea.vmem [#allocation2], %s243
        %p245 = scmp.lt.s32.totalorder %s20, 1
        %s246 = scalar_select %p245, %s20, 1
        %s247 = smul.addr %s246, 32
        %s248 = smul.addr %s247, 8
        %s249 = scalar_lea.vmem %s0, %s248
        %v250 = vld [vmem:[%s249] sm:$0xff]
        %v251 = vld [vmem:[%s249 + $0x8] sm:$0xff]
        %v252 = vld [vmem:[%s249 + $0x10] sm:$0xff]
        %v253 = vld [vmem:[%s249 + $0x18] sm:$0xff]
        %v254 = vld [vmem:[%s249 + $0x20] sm:$0xff]
        %v255 = vld [vmem:[%s249 + $0x28] sm:$0xff]
        %v256 = vld [vmem:[%s249 + $0x30] sm:$0xff]
        %v257 = vld [vmem:[%s249 + $0x38] sm:$0xff]
        %v258 = vld [vmem:[%s249 + $0x40] sm:$0xff]
        %v259 = vld [vmem:[%s249 + $0x48] sm:$0xff]
        %v260 = vld [vmem:[%s249 + $0x50] sm:$0xff]
        %v261 = vld [vmem:[%s249 + $0x58] sm:$0xff]
        %v262 = vld [vmem:[%s249 + $0x60] sm:$0xff]
        %v263 = vld [vmem:[%s249 + $0x68] sm:$0xff]
        %v264 = vld [vmem:[%s249 + $0x70] sm:$0xff]
        %v265 = vld [vmem:[%s249 + $0x78] sm:$0xff]
        %v266 = vld [vmem:[%s249 + $0x80] sm:$0xff]
        %v267 = vld [vmem:[%s249 + $0x88] sm:$0xff]
        %v268 = vld [vmem:[%s249 + $0x90] sm:$0xff]
        %v269 = vld [vmem:[%s249 + $0x98] sm:$0xff]
        %v270 = vld [vmem:[%s249 + $0xa0] sm:$0xff]
        %v271 = vld [vmem:[%s249 + $0xa8] sm:$0xff]
        %v272 = vld [vmem:[%s249 + $0xb0] sm:$0xff]
        %v273 = vld [vmem:[%s249 + $0xb8] sm:$0xff]
        %v274 = vld [vmem:[%s249 + $0xc0] sm:$0xff]
        %v275 = vld [vmem:[%s249 + $0xc8] sm:$0xff]
        %v276 = vld [vmem:[%s249 + $0xd0] sm:$0xff]
        %v277 = vld [vmem:[%s249 + $0xd8] sm:$0xff]
        %v278 = vld [vmem:[%s249 + $0xe0] sm:$0xff]
        %v279 = vld [vmem:[%s249 + $0xe8] sm:$0xff]
        %v280 = vld [vmem:[%s249 + $0xf0] sm:$0xff]
        %v281 = vld [vmem:[%s249 + $0xf8] sm:$0xff]
        %v282 = vld [vmem:[%s1] sm:$0xff]
        %v283 = vld [vmem:[%s1 + $0x8] sm:$0xff]
        %v284 = vld [vmem:[%s1 + $0x10] sm:$0xff]
        %v285 = vld [vmem:[%s1 + $0x18] sm:$0xff]
        %v286 = vld [vmem:[%s1 + $0x20] sm:$0xff]
        %v287 = vld [vmem:[%s1 + $0x28] sm:$0xff]
        %v288 = vld [vmem:[%s1 + $0x30] sm:$0xff]
        %v289 = vld [vmem:[%s1 + $0x38] sm:$0xff]
        %v290 = vld [vmem:[%s1 + $0x40] sm:$0xff]
        %v291 = vld [vmem:[%s1 + $0x48] sm:$0xff]
        %v292 = vld [vmem:[%s1 + $0x50] sm:$0xff]
        %v293 = vld [vmem:[%s1 + $0x58] sm:$0xff]
        %v294 = vld [vmem:[%s1 + $0x60] sm:$0xff]
        %v295 = vld [vmem:[%s1 + $0x68] sm:$0xff]
        %v296 = vld [vmem:[%s1 + $0x70] sm:$0xff]
        %v297 = vld [vmem:[%s1 + $0x78] sm:$0xff]
        %299 = vset.pattern.permute.xlu0 0
        %300 = vperm.xlu0 %299, %v282
        %v301 = vpop.permute.xlu0 %300
        %304 = vset.pattern.permute.xlu0 0
        %305 = vperm.xlu0 %304, %v283
        %v306 = vpop.permute.xlu0 %305
        %309 = vset.pattern.permute.xlu0 0
        %310 = vperm.xlu0 %309, %v284
        %v311 = vpop.permute.xlu0 %310
        %314 = vset.pattern.permute.xlu0 0
        %315 = vperm.xlu0 %314, %v285
        %v316 = vpop.permute.xlu0 %315
        %319 = vset.pattern.permute.xlu0 0
        %320 = vperm.xlu0 %319, %v286
        %v321 = vpop.permute.xlu0 %320
        %324 = vset.pattern.permute.xlu0 0
        %325 = vperm.xlu0 %324, %v287
        %v326 = vpop.permute.xlu0 %325
        %329 = vset.pattern.permute.xlu0 0
        %330 = vperm.xlu0 %329, %v288
        %v331 = vpop.permute.xlu0 %330
        %334 = vset.pattern.permute.xlu0 0
        %335 = vperm.xlu0 %334, %v289
        %v336 = vpop.permute.xlu0 %335
        %339 = vset.pattern.permute.xlu0 0
        %340 = vperm.xlu0 %339, %v290
        %v341 = vpop.permute.xlu0 %340
        %344 = vset.pattern.permute.xlu0 0
        %345 = vperm.xlu0 %344, %v291
        %v346 = vpop.permute.xlu0 %345
        %349 = vset.pattern.permute.xlu0 0
        %350 = vperm.xlu0 %349, %v292
        %v351 = vpop.permute.xlu0 %350
        %354 = vset.pattern.permute.xlu0 0
        %355 = vperm.xlu0 %354, %v293
        %v356 = vpop.permute.xlu0 %355
        %359 = vset.pattern.permute.xlu0 0
        %360 = vperm.xlu0 %359, %v294
        %v361 = vpop.permute.xlu0 %360
        %364 = vset.pattern.permute.xlu0 0
        %365 = vperm.xlu0 %364, %v295
        %v366 = vpop.permute.xlu0 %365
        %369 = vset.pattern.permute.xlu0 0
        %370 = vperm.xlu0 %369, %v296
        %v371 = vpop.permute.xlu0 %370
        %374 = vset.pattern.permute.xlu0 0
        %375 = vperm.xlu0 %374, %v297
        %v376 = vpop.permute.xlu0 %375
        %v378 = vmul.f32 %v250, %v301
        %v379 = vmul.f32 %v251, %v301
        %v380 = vmul.f32 %v252, %v306
        %v381 = vmul.f32 %v253, %v306
        %v382 = vmul.f32 %v254, %v311
        %v383 = vmul.f32 %v255, %v311
        %v384 = vmul.f32 %v256, %v316
        %v385 = vmul.f32 %v257, %v316
        %v386 = vmul.f32 %v258, %v321
        %v387 = vmul.f32 %v259, %v321
        %v388 = vmul.f32 %v260, %v326
        %v389 = vmul.f32 %v261, %v326
        %v390 = vmul.f32 %v262, %v331
        %v391 = vmul.f32 %v263, %v331
        %v392 = vmul.f32 %v264, %v336
        %v393 = vmul.f32 %v265, %v336
        %v394 = vmul.f32 %v266, %v341
        %v395 = vmul.f32 %v267, %v341
        %v396 = vmul.f32 %v268, %v346
        %v397 = vmul.f32 %v269, %v346
        %v398 = vmul.f32 %v270, %v351
        %v399 = vmul.f32 %v271, %v351
        %v400 = vmul.f32 %v272, %v356
        %v401 = vmul.f32 %v273, %v356
        %v402 = vmul.f32 %v274, %v361
        %v403 = vmul.f32 %v275, %v361
        %v404 = vmul.f32 %v276, %v366
        %v405 = vmul.f32 %v277, %v366
        %v406 = vmul.f32 %v278, %v371
        %v407 = vmul.f32 %v279, %v371
        %v408 = vmul.f32 %v280, %v376
        %v409 = vmul.f32 %v281, %v376
        %v410 = vadd.f32 %v378, %v380
        %v411 = vadd.f32 %v410, %v382
        %v412 = vadd.f32 %v411, %v384
        %v413 = vadd.f32 %v412, %v386
        %v414 = vadd.f32 %v413, %v388
        %v415 = vadd.f32 %v414, %v390
        %v416 = vadd.f32 %v415, %v392
        %v417 = vadd.f32 %v416, %v394
        %v418 = vadd.f32 %v417, %v396
        %v419 = vadd.f32 %v418, %v398
        %v420 = vadd.f32 %v419, %v400
        %v421 = vadd.f32 %v420, %v402
        %v422 = vadd.f32 %v421, %v404
        %v423 = vadd.f32 %v422, %v406
        %v424 = vadd.f32 %v423, %v408
        %v425 = vrot.slane %v424, 4
        %v426 = vadd.f32 %v424, %v425
        %v427 = vrot.slane %v426, 2
        %v428 = vadd.f32 %v426, %v427
        %v429 = vrot.slane %v428, 1
        %v430 = vadd.f32 %v428, %v429
        %v431 = vadd.f32 %v379, %v381
        %v432 = vadd.f32 %v431, %v383
        %v433 = vadd.f32 %v432, %v385
        %v434 = vadd.f32 %v433, %v387
        %v435 = vadd.f32 %v434, %v389
        %v436 = vadd.f32 %v435, %v391
        %v437 = vadd.f32 %v436, %v393
        %v438 = vadd.f32 %v437, %v395
        %v439 = vadd.f32 %v438, %v397
        %v440 = vadd.f32 %v439, %v399
        %v441 = vadd.f32 %v440, %v401
        %v442 = vadd.f32 %v441, %v403
        %v443 = vadd.f32 %v442, %v405
        %v444 = vadd.f32 %v443, %v407
        %v445 = vadd.f32 %v444, %v409
        %v446 = vrot.slane %v445, 4
        %v447 = vadd.f32 %v445, %v446
        %v448 = vrot.slane %v447, 2
        %v449 = vadd.f32 %v447, %v448
        %v450 = vrot.slane %v449, 1
        %v451 = vadd.f32 %v449, %v450
        %v452 = vxor.u32 %v430, 2147483648
        %v453 = vxor.u32 %v451, 2147483648
        %v454 = vmul.f32 %v452, 1.442695
        %v455 = vpow.pop %v454
        %v456 = vmul.f32 %v453, 1.442695
        %v457 = vpow.pop %v456
        %v458 = vadd.f32 %v455, 1.0
        %v459 = vadd.f32 %v457, 1.0
        %v460 = vrcp.pop %v458
        %v461 = vmul.f32 1.0, %v460
        %v462 = vrcp.pop %v459
        %v463 = vmul.f32 1.0, %v462
        %v464 = vadd.f32 %v250, %v251
        %465 = vadd.xlane.f32.xlu0 %v464
        %v466 = vpop.xlane.xlu0 %465
        %v467 = vadd.f32 %v252, %v253
        %468 = vadd.xlane.f32.xlu0 %v467
        %v469 = vpop.xlane.xlu0 %468
        %v470 = vadd.f32 %v254, %v255
        %471 = vadd.xlane.f32.xlu0 %v470
        %v472 = vpop.xlane.xlu0 %471
        %v473 = vadd.f32 %v256, %v257
        %474 = vadd.xlane.f32.xlu0 %v473
        %v475 = vpop.xlane.xlu0 %474
        %v476 = vadd.f32 %v258, %v259
        %477 = vadd.xlane.f32.xlu0 %v476
        %v478 = vpop.xlane.xlu0 %477
        %v479 = vadd.f32 %v260, %v261
        %480 = vadd.xlane.f32.xlu0 %v479
        %v481 = vpop.xlane.xlu0 %480
        %v482 = vadd.f32 %v262, %v263
        %483 = vadd.xlane.f32.xlu0 %v482
        %v484 = vpop.xlane.xlu0 %483
        %v485 = vadd.f32 %v264, %v265
        %486 = vadd.xlane.f32.xlu0 %v485
        %v487 = vpop.xlane.xlu0 %486
        %v488 = vadd.f32 %v266, %v267
        %489 = vadd.xlane.f32.xlu0 %v488
        %v490 = vpop.xlane.xlu0 %489
        %v491 = vadd.f32 %v268, %v269
        %492 = vadd.xlane.f32.xlu0 %v491
        %v493 = vpop.xlane.xlu0 %492
        %v494 = vadd.f32 %v270, %v271
        %495 = vadd.xlane.f32.xlu0 %v494
        %v496 = vpop.xlane.xlu0 %495
        %v497 = vadd.f32 %v272, %v273
        %498 = vadd.xlane.f32.xlu0 %v497
        %v499 = vpop.xlane.xlu0 %498
        %v500 = vadd.f32 %v274, %v275
        %501 = vadd.xlane.f32.xlu0 %v500
        %v502 = vpop.xlane.xlu0 %501
        %v503 = vadd.f32 %v276, %v277
        %504 = vadd.xlane.f32.xlu0 %v503
        %v505 = vpop.xlane.xlu0 %504
        %v506 = vadd.f32 %v278, %v279
        %507 = vadd.xlane.f32.xlu0 %v506
        %v508 = vpop.xlane.xlu0 %507
        %v509 = vadd.f32 %v280, %v281
        %510 = vadd.xlane.f32.xlu0 %v509
        %v511 = vpop.xlane.xlu0 %510
        %v512 = vmul.f32 %v466, 0.00390625
        %v513 = vmul.f32 %v469, 0.00390625
        %v514 = vmul.f32 %v472, 0.00390625
        %v515 = vmul.f32 %v475, 0.00390625
        %v516 = vmul.f32 %v478, 0.00390625
        %v517 = vmul.f32 %v481, 0.00390625
        %v518 = vmul.f32 %v484, 0.00390625
        %v519 = vmul.f32 %v487, 0.00390625
        %v520 = vmul.f32 %v490, 0.00390625
        %v521 = vmul.f32 %v493, 0.00390625
        %v522 = vmul.f32 %v496, 0.00390625
        %v523 = vmul.f32 %v499, 0.00390625
        %v524 = vmul.f32 %v502, 0.00390625
        %v525 = vmul.f32 %v505, 0.00390625
        %v526 = vmul.f32 %v508, 0.00390625
        %v527 = vmul.f32 %v511, 0.00390625
        %v528 = vld [vmem:[%s2] sm:$0xff]
        %v529 = vld [vmem:[%s2 + $0x8] sm:$0xff]
        %v530 = vld [vmem:[%s2 + $0x10] sm:$0xff]
        %v531 = vld [vmem:[%s2 + $0x18] sm:$0xff]
        %v532 = vld [vmem:[%s2 + $0x20] sm:$0xff]
        %v533 = vld [vmem:[%s2 + $0x28] sm:$0xff]
        %v534 = vld [vmem:[%s2 + $0x30] sm:$0xff]
        %v535 = vld [vmem:[%s2 + $0x38] sm:$0xff]
        %v536 = vld [vmem:[%s2 + $0x40] sm:$0xff]
        %v537 = vld [vmem:[%s2 + $0x48] sm:$0xff]
        %v538 = vld [vmem:[%s2 + $0x50] sm:$0xff]
        %v539 = vld [vmem:[%s2 + $0x58] sm:$0xff]
        %v540 = vld [vmem:[%s2 + $0x60] sm:$0xff]
        %v541 = vld [vmem:[%s2 + $0x68] sm:$0xff]
        %v542 = vld [vmem:[%s2 + $0x70] sm:$0xff]
        %v543 = vld [vmem:[%s2 + $0x78] sm:$0xff]
        %v544 = vmul.f32 %v528, %v512
        %v545 = vmul.f32 %v529, %v513
        %v546 = vmul.f32 %v530, %v514
        %v547 = vmul.f32 %v531, %v515
        %v548 = vmul.f32 %v532, %v516
        %v549 = vmul.f32 %v533, %v517
        %v550 = vmul.f32 %v534, %v518
        %v551 = vmul.f32 %v535, %v519
        %v552 = vmul.f32 %v536, %v520
        %v553 = vmul.f32 %v537, %v521
        %v554 = vmul.f32 %v538, %v522
        %v555 = vmul.f32 %v539, %v523
        %v556 = vmul.f32 %v540, %v524
        %v557 = vmul.f32 %v541, %v525
        %v558 = vmul.f32 %v542, %v526
        %v559 = vmul.f32 %v543, %v527
        %vm560 = vcmask 261120
        %v561 = vsel %vm560, %v544, 0.0
        %v562 = vsel %vm560, %v545, 0.0
        %v563 = vadd.f32 %v561, %v562
        %v564 = vsel %vm560, %v546, 0.0
        %v565 = vadd.f32 %v563, %v564
        %v566 = vsel %vm560, %v547, 0.0
        %v567 = vadd.f32 %v565, %v566
        %v568 = vsel %vm560, %v548, 0.0
        %v569 = vadd.f32 %v567, %v568
        %v570 = vsel %vm560, %v549, 0.0
        %v571 = vadd.f32 %v569, %v570
        %v572 = vsel %vm560, %v550, 0.0
        %v573 = vadd.f32 %v571, %v572
        %v574 = vsel %vm560, %v551, 0.0
        %v575 = vadd.f32 %v573, %v574
        %v576 = vsel %vm560, %v552, 0.0
        %v577 = vadd.f32 %v575, %v576
        %v578 = vsel %vm560, %v553, 0.0
        %v579 = vadd.f32 %v577, %v578
        %v580 = vsel %vm560, %v554, 0.0
        %v581 = vadd.f32 %v579, %v580
        %v582 = vsel %vm560, %v555, 0.0
        %v583 = vadd.f32 %v581, %v582
        %v584 = vsel %vm560, %v556, 0.0
        %v585 = vadd.f32 %v583, %v584
        %v586 = vsel %vm560, %v557, 0.0
        %v587 = vadd.f32 %v585, %v586
        %v588 = vsel %vm560, %v558, 0.0
        %v589 = vadd.f32 %v587, %v588
        %v590 = vsel %vm560, %v559, 0.0
        %v591 = vadd.f32 %v589, %v590
        %v592 = vrot.slane %v591, 4
        %v593 = vadd.f32 %v591, %v592
        %v594 = vrot.slane %v593, 2
        %v595 = vadd.f32 %v593, %v594
        %v596 = vrot.slane %v595, 1
        %v597 = vadd.f32 %v595, %v596
        %v598 = vld [vmem:[%s3] sm:$0x1]
        %v599 = vadd.f32 %v597, %v598
        %v600 = vmax.f32 %v599, 0.0
        %v601 = vld [vmem:[%s4] sm:$0xff]
        %v602 = vld [vmem:[%s4 + $0x8] sm:$0xff]
        %v603 = vld [vmem:[%s4 + $0x10] sm:$0xff]
        %v604 = vld [vmem:[%s4 + $0x18] sm:$0xff]
        %v605 = vld [vmem:[%s4 + $0x20] sm:$0xff]
        %v606 = vld [vmem:[%s4 + $0x28] sm:$0xff]
        %v607 = vld [vmem:[%s4 + $0x30] sm:$0xff]
        %v608 = vld [vmem:[%s4 + $0x38] sm:$0xff]
        %v609 = vld [vmem:[%s4 + $0x40] sm:$0xff]
        %v610 = vld [vmem:[%s4 + $0x48] sm:$0xff]
        %v611 = vld [vmem:[%s4 + $0x50] sm:$0xff]
        %v612 = vld [vmem:[%s4 + $0x58] sm:$0xff]
        %v613 = vld [vmem:[%s4 + $0x60] sm:$0xff]
        %v614 = vld [vmem:[%s4 + $0x68] sm:$0xff]
        %v615 = vld [vmem:[%s4 + $0x70] sm:$0xff]
        %v616 = vld [vmem:[%s4 + $0x78] sm:$0xff]
        %v617 = vlaneseq
        %v618 = vshrl.u32 %v617, 7
        %v619 = vsub.s32 0, %v618
        %v620 = vrot.slane %v600, %v619
        %v621 = vmul.f32 %v601, %v620
        %v622 = vmul.f32 %v602, %v620
        %v623 = vmul.f32 %v603, %v620
        %v624 = vmul.f32 %v604, %v620
        %v625 = vmul.f32 %v605, %v620
        %v626 = vmul.f32 %v606, %v620
        %v627 = vmul.f32 %v607, %v620
        %v628 = vmul.f32 %v608, %v620
        %v629 = vmul.f32 %v609, %v620
        %v630 = vmul.f32 %v610, %v620
        %v631 = vmul.f32 %v611, %v620
        %v632 = vmul.f32 %v612, %v620
        %v633 = vmul.f32 %v613, %v620
        %v634 = vmul.f32 %v614, %v620
        %v635 = vmul.f32 %v615, %v620
        %v636 = vmul.f32 %v616, %v620
        %v637 = vsel %vm560, %v621, 0.0
        %638 = vadd.xlane.f32.xlu0 %v637
        %v639 = vpop.xlane.xlu0 %638
        %v640 = vsel %vm560, %v622, 0.0
        %641 = vadd.xlane.f32.xlu0 %v640
        %v642 = vpop.xlane.xlu0 %641
        %v643 = vsel %vm560, %v623, 0.0
        %644 = vadd.xlane.f32.xlu0 %v643
        %v645 = vpop.xlane.xlu0 %644
        %v646 = vsel %vm560, %v624, 0.0
        %647 = vadd.xlane.f32.xlu0 %v646
        %v648 = vpop.xlane.xlu0 %647
        %v649 = vsel %vm560, %v625, 0.0
        %650 = vadd.xlane.f32.xlu0 %v649
        %v651 = vpop.xlane.xlu0 %650
        %v652 = vsel %vm560, %v626, 0.0
        %653 = vadd.xlane.f32.xlu0 %v652
        %v654 = vpop.xlane.xlu0 %653
        %v655 = vsel %vm560, %v627, 0.0
        %656 = vadd.xlane.f32.xlu0 %v655
        %v657 = vpop.xlane.xlu0 %656
        %v658 = vsel %vm560, %v628, 0.0
        %659 = vadd.xlane.f32.xlu0 %v658
        %v660 = vpop.xlane.xlu0 %659
        %v661 = vsel %vm560, %v629, 0.0
        %662 = vadd.xlane.f32.xlu0 %v661
        %v663 = vpop.xlane.xlu0 %662
        %v664 = vsel %vm560, %v630, 0.0
        %665 = vadd.xlane.f32.xlu0 %v664
        %v666 = vpop.xlane.xlu0 %665
        %v667 = vsel %vm560, %v631, 0.0
        %668 = vadd.xlane.f32.xlu0 %v667
        %v669 = vpop.xlane.xlu0 %668
        %v670 = vsel %vm560, %v632, 0.0
        %671 = vadd.xlane.f32.xlu0 %v670
        %v672 = vpop.xlane.xlu0 %671
        %v673 = vsel %vm560, %v633, 0.0
        %674 = vadd.xlane.f32.xlu0 %v673
        %v675 = vpop.xlane.xlu0 %674
        %v676 = vsel %vm560, %v634, 0.0
        %677 = vadd.xlane.f32.xlu0 %v676
        %v678 = vpop.xlane.xlu0 %677
        %v679 = vsel %vm560, %v635, 0.0
        %680 = vadd.xlane.f32.xlu0 %v679
        %v681 = vpop.xlane.xlu0 %680
        %v682 = vsel %vm560, %v636, 0.0
        %683 = vadd.xlane.f32.xlu0 %v682
        %v684 = vpop.xlane.xlu0 %683
        %v685 = vld [vmem:[%s5] sm:$0xff]
        %v686 = vld [vmem:[%s5 + $0x8] sm:$0xff]
        %v687 = vld [vmem:[%s5 + $0x10] sm:$0xff]
        %v688 = vld [vmem:[%s5 + $0x18] sm:$0xff]
        %v689 = vld [vmem:[%s5 + $0x20] sm:$0xff]
        %v690 = vld [vmem:[%s5 + $0x28] sm:$0xff]
        %v691 = vld [vmem:[%s5 + $0x30] sm:$0xff]
        %v692 = vld [vmem:[%s5 + $0x38] sm:$0xff]
        %v693 = vld [vmem:[%s5 + $0x40] sm:$0xff]
        %v694 = vld [vmem:[%s5 + $0x48] sm:$0xff]
        %v695 = vld [vmem:[%s5 + $0x50] sm:$0xff]
        %v696 = vld [vmem:[%s5 + $0x58] sm:$0xff]
        %v697 = vld [vmem:[%s5 + $0x60] sm:$0xff]
        %v698 = vld [vmem:[%s5 + $0x68] sm:$0xff]
        %v699 = vld [vmem:[%s5 + $0x70] sm:$0xff]
        %v700 = vld [vmem:[%s5 + $0x78] sm:$0xff]
        %v701 = vadd.f32 %v639, %v685
        %v702 = vadd.f32 %v642, %v686
        %v703 = vadd.f32 %v645, %v687
        %v704 = vadd.f32 %v648, %v688
        %v705 = vadd.f32 %v651, %v689
        %v706 = vadd.f32 %v654, %v690
        %v707 = vadd.f32 %v657, %v691
        %v708 = vadd.f32 %v660, %v692
        %v709 = vadd.f32 %v663, %v693
        %v710 = vadd.f32 %v666, %v694
        %v711 = vadd.f32 %v669, %v695
        %v712 = vadd.f32 %v672, %v696
        %v713 = vadd.f32 %v675, %v697
        %v714 = vadd.f32 %v678, %v698
        %v715 = vadd.f32 %v681, %v699
        %v716 = vadd.f32 %v684, %v700
        %v717 = vxor.u32 %v701, 2147483648
        %v718 = vxor.u32 %v702, 2147483648
        %v719 = vxor.u32 %v703, 2147483648
        %v720 = vxor.u32 %v704, 2147483648
        %v721 = vxor.u32 %v705, 2147483648
        %v722 = vxor.u32 %v706, 2147483648
        %v723 = vxor.u32 %v707, 2147483648
        %v724 = vxor.u32 %v708, 2147483648
        %v725 = vxor.u32 %v709, 2147483648
        %v726 = vxor.u32 %v710, 2147483648
        %v727 = vxor.u32 %v711, 2147483648
        %v728 = vxor.u32 %v712, 2147483648
        %v729 = vxor.u32 %v713, 2147483648
        %v730 = vxor.u32 %v714, 2147483648
        %v731 = vxor.u32 %v715, 2147483648
        %v732 = vxor.u32 %v716, 2147483648
        %v733 = vmul.f32 %v717, 1.442695
        %v734 = vpow.pop %v733
        %v735 = vmul.f32 %v718, 1.442695
        %v736 = vpow.pop %v735
        %v737 = vmul.f32 %v719, 1.442695
        %v738 = vpow.pop %v737
        %v739 = vmul.f32 %v720, 1.442695
        %v740 = vpow.pop %v739
        %v741 = vmul.f32 %v721, 1.442695
        %v742 = vpow.pop %v741
        %v743 = vmul.f32 %v722, 1.442695
        %v744 = vpow.pop %v743
        %v745 = vmul.f32 %v723, 1.442695
        %v746 = vpow.pop %v745
        %v747 = vmul.f32 %v724, 1.442695
        %v748 = vpow.pop %v747
        %v749 = vmul.f32 %v725, 1.442695
        %v750 = vpow.pop %v749
        %v751 = vmul.f32 %v726, 1.442695
        %v752 = vpow.pop %v751
        %v753 = vmul.f32 %v727, 1.442695
        %v754 = vpow.pop %v753
        %v755 = vmul.f32 %v728, 1.442695
        %v756 = vpow.pop %v755
        %v757 = vmul.f32 %v729, 1.442695
        %v758 = vpow.pop %v757
        %v759 = vmul.f32 %v730, 1.442695
        %v760 = vpow.pop %v759
        %v761 = vmul.f32 %v731, 1.442695
        %v762 = vpow.pop %v761
        %v763 = vmul.f32 %v732, 1.442695
        %v764 = vpow.pop %v763
        %v765 = vadd.f32 %v734, 1.0
        %v766 = vadd.f32 %v736, 1.0
        %v767 = vadd.f32 %v738, 1.0
        %v768 = vadd.f32 %v740, 1.0
        %v769 = vadd.f32 %v742, 1.0
        %v770 = vadd.f32 %v744, 1.0
        %v771 = vadd.f32 %v746, 1.0
        %v772 = vadd.f32 %v748, 1.0
        %v773 = vadd.f32 %v750, 1.0
        %v774 = vadd.f32 %v752, 1.0
        %v775 = vadd.f32 %v754, 1.0
        %v776 = vadd.f32 %v756, 1.0
        %v777 = vadd.f32 %v758, 1.0
        %v778 = vadd.f32 %v760, 1.0
        %v779 = vadd.f32 %v762, 1.0
        %v780 = vadd.f32 %v764, 1.0
        %v781 = vrcp.pop %v765
        %v782 = vmul.f32 1.0, %v781
        %v783 = vrcp.pop %v766
        %v784 = vmul.f32 1.0, %v783
        %v785 = vrcp.pop %v767
        %v786 = vmul.f32 1.0, %v785
        %v787 = vrcp.pop %v768
        %v788 = vmul.f32 1.0, %v787
        %v789 = vrcp.pop %v769
        %v790 = vmul.f32 1.0, %v789
        %v791 = vrcp.pop %v770
        %v792 = vmul.f32 1.0, %v791
        %v793 = vrcp.pop %v771
        %v794 = vmul.f32 1.0, %v793
        %v795 = vrcp.pop %v772
        %v796 = vmul.f32 1.0, %v795
        %v797 = vrcp.pop %v773
        %v798 = vmul.f32 1.0, %v797
        %v799 = vrcp.pop %v774
        %v800 = vmul.f32 1.0, %v799
        %v801 = vrcp.pop %v775
        %v802 = vmul.f32 1.0, %v801
        %v803 = vrcp.pop %v776
        %v804 = vmul.f32 1.0, %v803
        %v805 = vrcp.pop %v777
        %v806 = vmul.f32 1.0, %v805
        %v807 = vrcp.pop %v778
        %v808 = vmul.f32 1.0, %v807
        %v809 = vrcp.pop %v779
        %v810 = vmul.f32 1.0, %v809
        %v811 = vrcp.pop %v780
        %v812 = vmul.f32 1.0, %v811
        %814 = vset.pattern.permute.xlu0 0
        %815 = vperm.xlu0 %814, %v782
        %v816 = vpop.permute.xlu0 %815
        %819 = vset.pattern.permute.xlu0 0
        %820 = vperm.xlu0 %819, %v784
        %v821 = vpop.permute.xlu0 %820
        %824 = vset.pattern.permute.xlu0 0
        %825 = vperm.xlu0 %824, %v786
        %v826 = vpop.permute.xlu0 %825
        %829 = vset.pattern.permute.xlu0 0
        %830 = vperm.xlu0 %829, %v788
        %v831 = vpop.permute.xlu0 %830
        %834 = vset.pattern.permute.xlu0 0
        %835 = vperm.xlu0 %834, %v790
        %v836 = vpop.permute.xlu0 %835
        %839 = vset.pattern.permute.xlu0 0
        %840 = vperm.xlu0 %839, %v792
        %v841 = vpop.permute.xlu0 %840
        %844 = vset.pattern.permute.xlu0 0
        %845 = vperm.xlu0 %844, %v794
        %v846 = vpop.permute.xlu0 %845
        %849 = vset.pattern.permute.xlu0 0
        %850 = vperm.xlu0 %849, %v796
        %v851 = vpop.permute.xlu0 %850
        %854 = vset.pattern.permute.xlu0 0
        %855 = vperm.xlu0 %854, %v798
        %v856 = vpop.permute.xlu0 %855
        %859 = vset.pattern.permute.xlu0 0
        %860 = vperm.xlu0 %859, %v800
        %v861 = vpop.permute.xlu0 %860
        %864 = vset.pattern.permute.xlu0 0
        %865 = vperm.xlu0 %864, %v802
        %v866 = vpop.permute.xlu0 %865
        %869 = vset.pattern.permute.xlu0 0
        %870 = vperm.xlu0 %869, %v804
        %v871 = vpop.permute.xlu0 %870
        %874 = vset.pattern.permute.xlu0 0
        %875 = vperm.xlu0 %874, %v806
        %v876 = vpop.permute.xlu0 %875
        %879 = vset.pattern.permute.xlu0 0
        %880 = vperm.xlu0 %879, %v808
        %v881 = vpop.permute.xlu0 %880
        %884 = vset.pattern.permute.xlu0 0
        %885 = vperm.xlu0 %884, %v810
        %v886 = vpop.permute.xlu0 %885
        %889 = vset.pattern.permute.xlu0 0
        %890 = vperm.xlu0 %889, %v812
        %v891 = vpop.permute.xlu0 %890
        %v893 = vadd.f32 %v461, %v816
        %v894 = vadd.f32 %v463, %v816
        %v895 = vadd.f32 %v461, %v821
        %v896 = vadd.f32 %v463, %v821
        %v897 = vadd.f32 %v461, %v826
        %v898 = vadd.f32 %v463, %v826
        %v899 = vadd.f32 %v461, %v831
        %v900 = vadd.f32 %v463, %v831
        %v901 = vadd.f32 %v461, %v836
        %v902 = vadd.f32 %v463, %v836
        %v903 = vadd.f32 %v461, %v841
        %v904 = vadd.f32 %v463, %v841
        %v905 = vadd.f32 %v461, %v846
        %v906 = vadd.f32 %v463, %v846
        %v907 = vadd.f32 %v461, %v851
        %v908 = vadd.f32 %v463, %v851
        %v909 = vadd.f32 %v461, %v856
        %v910 = vadd.f32 %v463, %v856
        %v911 = vadd.f32 %v461, %v861
        %v912 = vadd.f32 %v463, %v861
        %v913 = vadd.f32 %v461, %v866
        %v914 = vadd.f32 %v463, %v866
        %v915 = vadd.f32 %v461, %v871
        %v916 = vadd.f32 %v463, %v871
        %v917 = vadd.f32 %v461, %v876
        %v918 = vadd.f32 %v463, %v876
        %v919 = vadd.f32 %v461, %v881
        %v920 = vadd.f32 %v463, %v881
        %v921 = vadd.f32 %v461, %v886
        %v922 = vadd.f32 %v463, %v886
        %v923 = vadd.f32 %v461, %v891
        %v924 = vadd.f32 %v463, %v891
        %v925 = vmul.f32 %v250, %v893
        %v926 = vmul.f32 %v251, %v894
        %v927 = vmul.f32 %v252, %v895
        %v928 = vmul.f32 %v253, %v896
        %v929 = vmul.f32 %v254, %v897
        %v930 = vmul.f32 %v255, %v898
        %v931 = vmul.f32 %v256, %v899
        %v932 = vmul.f32 %v257, %v900
        %v933 = vmul.f32 %v258, %v901
        %v934 = vmul.f32 %v259, %v902
        %v935 = vmul.f32 %v260, %v903
        %v936 = vmul.f32 %v261, %v904
        %v937 = vmul.f32 %v262, %v905
        %v938 = vmul.f32 %v263, %v906
        %v939 = vmul.f32 %v264, %v907
        %v940 = vmul.f32 %v265, %v908
        %v941 = vmul.f32 %v266, %v909
        %v942 = vmul.f32 %v267, %v910
        %v943 = vmul.f32 %v268, %v911
        %v944 = vmul.f32 %v269, %v912
        %v945 = vmul.f32 %v270, %v913
        %v946 = vmul.f32 %v271, %v914
        %v947 = vmul.f32 %v272, %v915
        %v948 = vmul.f32 %v273, %v916
        %v949 = vmul.f32 %v274, %v917
        %v950 = vmul.f32 %v275, %v918
        %v951 = vmul.f32 %v276, %v919
        %v952 = vmul.f32 %v277, %v920
        %v953 = vmul.f32 %v278, %v921
        %v954 = vmul.f32 %v279, %v922
        %v955 = vmul.f32 %v280, %v923
        %v956 = vmul.f32 %v281, %v924
        %957 = vst [vmem:[%s244] sm:$0xff] %v925
        %958 = vst [vmem:[%s244 + $0x8] sm:$0xff] %v926
        %959 = vst [vmem:[%s244 + $0x10] sm:$0xff] %v927
        %960 = vst [vmem:[%s244 + $0x18] sm:$0xff] %v928
        %961 = vst [vmem:[%s244 + $0x20] sm:$0xff] %v929
        %962 = vst [vmem:[%s244 + $0x28] sm:$0xff] %v930
        %963 = vst [vmem:[%s244 + $0x30] sm:$0xff] %v931
        %964 = vst [vmem:[%s244 + $0x38] sm:$0xff] %v932
        %965 = vst [vmem:[%s244 + $0x40] sm:$0xff] %v933
        %966 = vst [vmem:[%s244 + $0x48] sm:$0xff] %v934
        %967 = vst [vmem:[%s244 + $0x50] sm:$0xff] %v935
        %968 = vst [vmem:[%s244 + $0x58] sm:$0xff] %v936
        %969 = vst [vmem:[%s244 + $0x60] sm:$0xff] %v937
        %970 = vst [vmem:[%s244 + $0x68] sm:$0xff] %v938
        %971 = vst [vmem:[%s244 + $0x70] sm:$0xff] %v939
        %972 = vst [vmem:[%s244 + $0x78] sm:$0xff] %v940
        %973 = vst [vmem:[%s244 + $0x80] sm:$0xff] %v941
        %974 = vst [vmem:[%s244 + $0x88] sm:$0xff] %v942
        %975 = vst [vmem:[%s244 + $0x90] sm:$0xff] %v943
        %976 = vst [vmem:[%s244 + $0x98] sm:$0xff] %v944
        %977 = vst [vmem:[%s244 + $0xa0] sm:$0xff] %v945
        %978 = vst [vmem:[%s244 + $0xa8] sm:$0xff] %v946
        %979 = vst [vmem:[%s244 + $0xb0] sm:$0xff] %v947
        %980 = vst [vmem:[%s244 + $0xb8] sm:$0xff] %v948
        %981 = vst [vmem:[%s244 + $0xc0] sm:$0xff] %v949
        %982 = vst [vmem:[%s244 + $0xc8] sm:$0xff] %v950
        %983 = vst [vmem:[%s244 + $0xd0] sm:$0xff] %v951
        %984 = vst [vmem:[%s244 + $0xd8] sm:$0xff] %v952
        %985 = vst [vmem:[%s244 + $0xe0] sm:$0xff] %v953
        %986 = vst [vmem:[%s244 + $0xe8] sm:$0xff] %v954
        %987 = vst [vmem:[%s244 + $0xf0] sm:$0xff] %v955
        %988 = vst [vmem:[%s244 + $0xf8] sm:$0xff] %v956
        %s989 = sand.u32 %s159, 1
        %s990 = scalar_lea.sflag [#allocation3], %s989
        %s991 = sand.u32 %s159, 1
        %s992 = smul.addr %s991, 256
        %s993 = scalar_lea.vmem [#allocation2], %s992
        // Predicated region
        $region45: #{tpu_custom_call.1} parent=43 // pred_check
          %p994 = pneg %p169
        $region46: #{tpu_custom_call.1} parent=43 // pred_check_branch
          %996 = sbr.rel (%p994) target = $region48
        $region47: #{tpu_custom_call.1} parent=43 // pred_region
          %s998 = ssub.s32 4096, 4096
          %999 = vsyncadd %s990, %s998
          %s1000 = smul.addr %s20, 32
          %s1001 = smul.addr %s1000, 128
          %s1002 = scalar_lea.hbm %s6, %s1001
          %s1003 = sshll.u32 %s993, 4
          %s1004 = int_to_ptr.vmem [resolvable:$true] %s1003
          %1009 = dma.vmem_to_hbm [thread:$0]  %s1004, 4096, %s1002, %s990, 256, 256, 16
        $region48: #{tpu_custom_call.1} parent=43 // pred_fallthru
          _
      $region44: #{tpu_custom_call.1} parent=5 // pred_fallthru
        _
      %p1010 = scmp.le.s32.totalorder 2, %s15
      // Predicated region
      $region49: #{tpu_custom_call.1} parent=5 // pred_check
        %p1011 = pneg %p1010
      $region50: #{tpu_custom_call.1} parent=5 // pred_check_branch
        %1013 = sbr.rel (%p1011) target = $region52
      $region51: #{tpu_custom_call.1} parent=5 // pred_region
        %s1014 = ssub.s32 %s15, 2
        // Predicated region
        $region53: #{tpu_custom_call.1} parent=51 // pred_check
          %p1015 = pneg %p175
        $region54: #{tpu_custom_call.1} parent=51 // pred_check_branch
          %1017 = sbr.rel (%p1015) target = $region56
        $region55: #{tpu_custom_call.1} parent=51 // pred_region
          %s1018 = sand.u32 %s160, 1
          %s1019 = scalar_lea.sflag [#allocation3], %s1018
          %s1020 = sand.u32 %s160, 1
          %s1021 = smul.addr %s1020, 256
          %s1022 = scalar_lea.vmem [#allocation2], %s1021
          %1023 = dma.done %s1019, 4096
        $region56: #{tpu_custom_call.1} parent=51 // pred_fallthru
          _
      $region52: #{tpu_custom_call.1} parent=5 // pred_fallthru
        _
    $region6: #{tpu_custom_call.1} parent=1 // loop_footer
      %s19 = sadd.s32 1, %s15
    $region7: #{tpu_custom_call.1} parent=1 // loop_footer_branch
      %14 = sbr.rel target = $region3
    $region8: #{tpu_custom_call.1} parent=1 // loop_exit
      _
    %1024 = vsyncpa [#allocation3], 1
    %s1025 = scalar_lea.sflag [#allocation3], 1
    %1026 = vsyncpa %s1025, 1

</llo_original>
